<compile_context>
chip_gen: v7x
topology: tpu7x:2x2x1
jax: 0.10.0
libtpu: 0.0.40
codegen_flags: <defaults>
</compile_context>

<pallas_src>
import functools

import jax
import jax.numpy as jnp
from jax.experimental import pallas as pl
from jax.experimental.pallas import tpu as pltpu

LANE = 128
_HIGHEST = jax.lax.Precision.HIGHEST


def _round_up(n: int, m: int) -> int:
    return ((n + m - 1) // m) * m


# ----------------------------- Pallas kernel --------------------------------
def _apply_act(h, activation: str):
    if activation == "silu":
        return h * jax.nn.sigmoid(h)
    if activation == "relu":
        return jnp.maximum(h, 0.0)
    if activation == "tanh":
        return jnp.tanh(h)
    raise ValueError(f"unsupported activation: {activation}")


def _mlp_kernel(x_ref, w1_ref, b1_ref, w2_ref, b2_ref, o_ref,
                *, activation: str, residual: bool, last_act: bool):
    # x_ref:  (TM, D_in_p)    w1_ref: (D_in_p, H_p)   b1_ref: (1, H_p)   [f32]
    # w2_ref: (H_p, D_out_p)  b2_ref: (1, D_out_p)    o_ref:  (TM, D_out_p)
    x = x_ref[...]                                   # keep native dtype -> MXU path
    h = jnp.dot(x, w1_ref[...], preferred_element_type=jnp.float32) + b1_ref[...]
    h = _apply_act(h, activation)
    h = h.astype(w2_ref.dtype)                       # no-op for f32; bf16 MXU otherwise
    y = jnp.dot(h, w2_ref[...], preferred_element_type=jnp.float32) + b2_ref[...]
    if last_act:
        y = _apply_act(y, activation)
    if residual:
        y = y + x.astype(y.dtype)
    o_ref[...] = y.astype(o_ref.dtype)


# ------------------------------- Wrapper -------------------------------------
def base_mlp_forward(x, pp, *, activation: str = "silu", residual: bool = False,
                     last_act: bool = False, tile_rows: int = 512,
                     x_is_padded: bool = False, keep_padded_output: bool = False):
    """Apply BaseMLP over the last dim of `x` with one fused Pallas kernel.

    `pp` holds lane-padded parameters (see pad_mlp_params). If x_is_padded, the
    last dim of x is already d_in_p (zeros in the pad columns). If
    keep_padded_output, the result keeps the lane-padded last dim (zeros in pad)."""
    d_in, hidden, d_out = pp["d_in"], pp["hidden"], pp["d_out"]
    d_in_p, hid_p, d_out_p = pp["d_in_p"], pp["hid_p"], pp["d_out_p"]

    if residual and d_out != d_in:
        raise ValueError(
            f"residual=True requires output_dim == input_dim, got {d_out} != {d_in}")

    lead_shape = x.shape[:-1]
    expected = d_in_p if x_is_padded else d_in
    if x.shape[-1] != expected:
        raise ValueError(f"expected last dim {expected}, got {x.shape[-1]}")

    # Pad feature dim to the lane width (weights are already padded with zeros).
    if not x_is_padded and d_in_p != d_in:
        x = jnp.pad(x, [(0, 0)] * (x.ndim - 1) + [(0, d_in_p - d_in)])
    x2 = x.reshape(-1, d_in_p)
    n_rows = x2.shape[0]

    # Only pad rows up to a sublane multiple (<=7 rows); the ragged last grid
    # block (if any) is handled by Pallas's masked edge behaviour.
    n8 = _round_up(n_rows, 8)
    if n8 != n_rows:
        x2 = jnp.pad(x2, ((0, n8 - n_rows), (0, 0)))

    tm = min(_round_up(int(tile_rows), 8), n8)
    grid = pl.cdiv(n8, tm)

    itemsize = jnp.dtype(x2.dtype).itemsize
    vmem_est = (2 * tm * (d_in_p + d_out_p) * itemsize          # double-buffered tiles
                + 2 * (d_in_p * hid_p + hid_p * d_out_p) * itemsize  # weights (2 bufs)
                + 2 * (hid_p + d_out_p) * 4                     # biases
                + tm * (hid_p + d_out_p) * 4)                   # f32 intermediates
    vmem_limit = int(min(max(vmem_est * 1.5, 32 * 1024 * 1024), 64 * 1024 * 1024))

    kernel = functools.partial(_mlp_kernel, activation=activation,
                               residual=residual, last_act=last_act)

    out = pl.pallas_call(
        kernel,
        out_shape=jax.ShapeDtypeStruct((n8, d_out_p), x2.dtype),
        grid_spec=pltpu.PrefetchScalarGridSpec(
            num_scalar_prefetch=0,
            grid=(grid,),
            in_specs=[
                pl.BlockSpec((tm, d_in_p), lambda i: (i, 0)),       # x rows tile
                pl.BlockSpec((d_in_p, hid_p), lambda i: (0, 0)),    # W1 (whole, padded)
                pl.BlockSpec((1, hid_p), lambda i: (0, 0)),         # b1 (f32)
                pl.BlockSpec((hid_p, d_out_p), lambda i: (0, 0)),   # W2 (whole, padded)
                pl.BlockSpec((1, d_out_p), lambda i: (0, 0)),       # b2 (f32)
            ],
            out_specs=pl.BlockSpec((tm, d_out_p), lambda i: (i, 0)),
        ),
        compiler_params=pltpu.CompilerParams(
            dimension_semantics=("parallel",),
            vmem_limit_bytes=vmem_limit,
        ),
    )(x2, pp["w1"], pp["b1"], pp["w2"], pp["b2"])

    if n8 != n_rows:
        out = out[:n_rows]
    if (not keep_padded_output) and d_out_p != d_out:
        out = out[:, :d_out]
    out_dim = d_out_p if keep_padded_output else d_out
    return out.reshape(lead_shape + (out_dim,))


# --------------------------- Parameter construction --------------------------
def init_base_mlp_params(key, input_dim, hidden_dim, output_dim, *, flat=False,
                         dtype=jnp.float32):
    """Matches torch.nn.Linear default init (uniform +/- 1/sqrt(fan_in)).
    Weights stored as [in, out] (transposed w.r.t. torch's [out, in])."""
    if flat:
        hidden_dim = 4 * hidden_dim      # BaseMLP.__init__ with flat=True
    k1, k2, k3, k4 = jax.random.split(key, 4)
    bound1 = 1.0 / jnp.sqrt(jnp.float32(input_dim))
    bound2 = 1.0 / jnp.sqrt(jnp.float32(hidden_dim))
    w1 = jax.random.uniform(k1, (input_dim, hidden_dim), dtype, -bound1, bound1)
    b1 = jax.random.uniform(k2, (hidden_dim,), jnp.float32, -bound1, bound1)
    w2 = jax.random.uniform(k3, (hidden_dim, output_dim), dtype, -bound2, bound2)
    b2 = jax.random.uniform(k4, (output_dim,), jnp.float32, -bound2, bound2)
    return {"w1": w1, "b1": b1, "w2": w2, "b2": b2,
            "d_in": input_dim, "hidden": hidden_dim, "d_out": output_dim}


def _pad2(a, rows, cols):
    out = jnp.zeros((rows, cols), a.dtype)
    return out.at[:a.shape[0], :a.shape[1]].set(a)


def pad_mlp_params(p, lane=LANE):
    """Zero-pad feature dims to multiples of the lane width (done once, offline)."""
    d_in, hidden, d_out = p["d_in"], p["hidden"], p["d_out"]
    d_in_p = _round_up(d_in, lane)
    hid_p = _round_up(hidden, lane)
    d_out_p = _round_up(d_out, lane)
    return {
        "w1": _pad2(p["w1"], d_in_p, hid_p),
        "b1": _pad2(p["b1"].reshape(1, -1).astype(jnp.float32), 1, hid_p),
        "w2": _pad2(p["w2"], hid_p, d_out_p),
        "b2": _pad2(p["b2"].reshape(1, -1).astype(jnp.float32), 1, d_out_p),
        "d_in": d_in, "hidden": hidden, "d_out": d_out,
        "d_in_p": d_in_p, "hid_p": hid_p, "d_out_p": d_out_p,
    }


def init_equivariant_scalar_net_params(key, n_vector_input, hidden_dim,
                                       n_scalar_input=0, *, flat=True):
    k1, k2, k3 = jax.random.split(key, 3)
    input_dim = n_vector_input * n_vector_input + n_scalar_input
    return {
        "in":  init_base_mlp_params(k1, input_dim, hidden_dim, hidden_dim, flat=flat),
        "vec": init_base_mlp_params(k2, hidden_dim, hidden_dim, n_vector_input, flat=flat),
        "sca": init_base_mlp_params(k3, hidden_dim, hidden_dim, hidden_dim, flat=flat),
    }


def pad_scalar_net_params(p):
    return {"in": pad_mlp_params(p["in"]),
            "vec": pad_mlp_params(p["vec"]),
            "sca": pad_mlp_params(p["sca"])}


def init_egmn_params(key, n_layers, n_vector_input, hidden_dim, n_scalar_input,
                     *, flat=False):
    layers = []
    for i in range(n_layers):
        key, sub = jax.random.split(key)
        layers.append(init_equivariant_scalar_net_params(
            sub, n_vector_input + i, hidden_dim,
            n_scalar_input if i == 0 else hidden_dim, flat=flat))
    return layers


# ------------------------ Forward pass (kernel path) -------------------------
def equivariant_scalar_net_forward(Z, scalars, pp, *, activation="silu",
                                   norm=False, flat=False):
    """Z: [N, 3, K]; scalars: [N, L] or None. Returns (vector [N,3], scalar [N,hidden])."""
    N, _, K = Z.shape
    # TODO(synk): the K x K gram and Z @ vec_scalar contractions (K ~ 3-5, far below
    # an (8,128) tile) are left to XLA; a Pallas kernel adds nothing at these sizes.
    gram = jnp.einsum("bji,bjk->bik", Z, Z, precision=_HIGHEST).reshape(N, K * K)
    if norm:  # F.normalize(p=2, dim=-1, eps=1e-12)
        gram = gram / jnp.maximum(
            jnp.linalg.norm(gram, axis=-1, keepdims=True), 1e-12)
    s_in = gram if scalars is None else jnp.concatenate([gram, scalars], axis=-1)

    act = "tanh" if flat else activation
    # Keep the hidden activations lane-padded between the chained MLPs (pad cols are 0).
    s_hidden = base_mlp_forward(s_in, pp["in"], activation=act, last_act=True,
                                keep_padded_output=True)
    vec_scalar = base_mlp_forward(s_hidden, pp["vec"], activation=act,
                                  x_is_padded=True)
    vector = jnp.einsum("bij,bj->bi", Z, vec_scalar, precision=_HIGHEST)
    scalar_out = base_mlp_forward(s_hidden, pp["sca"], activation=act,
                                  x_is_padded=True)
    return vector, scalar_out


def egmn_forward(vectors, scalars, padded_layer_params, *, activation="silu",
                 norm=False, flat=False):
    """vectors: list of [N, 3] arrays; scalars: [N, L]. Returns (vector, scalars)."""
    cur_vectors = list(vectors)
    for pp in padded_layer_params:
        Z = jnp.stack(cur_vectors, axis=-1)         # [N, 3, K]
        vector, scalars = equivariant_scalar_net_forward(
            Z, scalars, pp, activation=activation, norm=norm, flat=flat)
        cur_vectors.append(vector)
    return cur_vectors[-1], scalars


# --------------------------- Pure-JAX reference -------------------------------
def _ref_mlp(x, p, *, activation, residual=False, last_act=False):
    h = jnp.dot(x, p["w1"], precision=_HIGHEST) + p["b1"]
    h = _apply_act(h, activation)
    y = jnp.dot(h, p["w2"], precision=_HIGHEST) + p["b2"]
    if last_act:
        y = _apply_act(y, activation)
    if residual:
        y = y + x
    return y


def _ref_scalar_net(Z, scalars, p, *, activation, norm, flat):
    N, _, K = Z.shape
    gram = jnp.einsum("bji,bjk->bik", Z, Z, precision=_HIGHEST).reshape(N, K * K)
    if norm:
        gram = gram / jnp.maximum(
            jnp.linalg.norm(gram, axis=-1, keepdims=True), 1e-12)
    s_in = gram if scalars is None else jnp.concatenate([gram, scalars], axis=-1)
    act = "tanh" if flat else activation
    s = _ref_mlp(s_in, p["in"], activation=act, last_act=True)
    vs = _ref_mlp(s, p["vec"], activation=act)
    vector = jnp.einsum("bij,bj->bi", Z, vs, precision=_HIGHEST)
    s_out = _ref_mlp(s, p["sca"], activation=act)
    return vector, s_out


def egmn_reference(vectors, scalars, layer_params, *, activation="silu",
                   norm=False, flat=False):
    cur = list(vectors)
    for p in layer_params:
        Z = jnp.stack(cur, axis=-1)
        v, scalars = _ref_scalar_net(Z, scalars, p, activation=activation,
                                     norm=norm, flat=flat)
        cur.append(v)
    return cur[-1], scalars


# ---------------------------------- Main --------------------------------------
if __name__ == "__main__":
    key = jax.random.PRNGKey(0)
    kparams, kdata = jax.random.split(key)

    # Small shapes: N=16 nodes, 2 layers, 3 input vectors, hidden=32, 8 input scalars.
    n_layers, n_vector_input, hidden_dim, n_scalar_input = 2, 3, 32, 8
    N = 16
    activation, norm, flat = "silu", False, False   # EGMN defaults (nn.SiLU)

    raw_params = init_egmn_params(kparams, n_layers, n_vector_input, hidden_dim,
                                  n_scalar_input, flat=flat)
    padded_params = [pad_scalar_net_params(p) for p in raw_params]

    kv, ks = jax.random.split(kdata)
    vec_keys = jax.random.split(kv, n_vector_input)
    vectors = [jax.random.normal(k, (N, 3), jnp.float32) for k in vec_keys]
    scalars = jax.random.normal(ks, (N, n_scalar_input), jnp.float32)

    vec_out, sca_out = egmn_forward(vectors, scalars, padded_params,
                                    activation=activation, norm=norm, flat=flat)
    jax.block_until_ready((vec_out, sca_out))

    vec_ref, sca_ref = egmn_reference(vectors, scalars, raw_params,
                                      activation=activation, norm=norm, flat=flat)

    assert vec_out.shape == (N, 3), vec_out.shape
    assert sca_out.shape == (N, hidden_dim), sca_out.shape
    assert jnp.allclose(vec_out, vec_ref, atol=2e-3, rtol=2e-3), \
        float(jnp.max(jnp.abs(vec_out - vec_ref)))
    assert jnp.allclose(sca_out, sca_ref, atol=2e-3, rtol=2e-3), \
        float(jnp.max(jnp.abs(sca_out - sca_ref)))

    print("KERNEL_OK")
</pallas_src>

<mosaic_0001>
module attributes {stable_mosaic.version = 11 : i64} {
  func.func @_mlp_kernel(%arg0: i32, %arg1: memref<16x128xf32, #tpu.memory_space<vmem>>, %arg2: memref<128x128xf32, #tpu.memory_space<vmem>>, %arg3: memref<1x128xf32, #tpu.memory_space<vmem>>, %arg4: memref<128x128xf32, #tpu.memory_space<vmem>>, %arg5: memref<1x128xf32, #tpu.memory_space<vmem>>, %arg6: memref<16x128xf32, #tpu.memory_space<vmem>>) attributes {dimension_semantics = [#tpu.dimension_semantics<parallel>], iteration_bounds = array<i64: 1>, scalar_prefetch = 0 : i64, scratch_operands = 0 : i64, tpu.core_type = #tpu.core_type<tc>, window_params = [{transform_indices = @transform_0, window_bounds = array<i64: 16, 128>}, {pipeline_mode = #tpu.pipeline_mode<synchronous>, transform_indices = @transform_1, window_bounds = array<i64: 128, 128>}, {pipeline_mode = #tpu.pipeline_mode<synchronous>, transform_indices = @transform_2, window_bounds = array<i64: 1, 128>}, {pipeline_mode = #tpu.pipeline_mode<synchronous>, transform_indices = @transform_3, window_bounds = array<i64: 128, 128>}, {pipeline_mode = #tpu.pipeline_mode<synchronous>, transform_indices = @transform_4, window_bounds = array<i64: 1, 128>}, {transform_indices = @transform_5, window_bounds = array<i64: 16, 128>}]} {
    %c0 = arith.constant 0 : index
    %c0_0 = arith.constant 0 : index
    %0 = vector.load %arg1[%c0, %c0_0] : memref<16x128xf32, #tpu.memory_space<vmem>>, vector<16x128xf32>
    %c0_1 = arith.constant 0 : index
    %c0_2 = arith.constant 0 : index
    %1 = vector.load %arg2[%c0_1, %c0_2] : memref<128x128xf32, #tpu.memory_space<vmem>>, vector<128x128xf32>
    %cst = arith.constant dense<0.000000e+00> : vector<16x128xf32>
    %2 = tpu.matmul %0, %1, %cst {dimension_numbers = #tpu.dot_dimension_numbers<[1], [0], [0], [1], [0, 0, 1, 1], [], []>} : vector<16x128xf32>, vector<128x128xf32>, vector<16x128xf32> -> vector<16x128xf32>
    %c0_3 = arith.constant 0 : index
    %c0_4 = arith.constant 0 : index
    %3 = vector.load %arg3[%c0_3, %c0_4] : memref<1x128xf32, #tpu.memory_space<vmem>>, vector<1x128xf32>
    %4 = vector.broadcast %3 : vector<1x128xf32> to vector<16x128xf32>
    %5 = arith.addf %2, %4 : vector<16x128xf32>
    %6 = arith.negf %5 : vector<16x128xf32>
    %7 = math.exp %6 : vector<16x128xf32>
    %cst_5 = arith.constant 1.000000e+00 : f32
    %8 = vector.broadcast %cst_5 : f32 to vector<16x128xf32>
    %9 = arith.addf %8, %7 : vector<16x128xf32>
    %10 = arith.divf %8, %9 : vector<16x128xf32>
    %11 = arith.mulf %5, %10 : vector<16x128xf32>
    %c0_6 = arith.constant 0 : index
    %c0_7 = arith.constant 0 : index
    %12 = vector.load %arg4[%c0_6, %c0_7] : memref<128x128xf32, #tpu.memory_space<vmem>>, vector<128x128xf32>
    %cst_8 = arith.constant dense<0.000000e+00> : vector<16x128xf32>
    %13 = tpu.matmul %11, %12, %cst_8 {dimension_numbers = #tpu.dot_dimension_numbers<[1], [0], [0], [1], [0, 0, 1, 1], [], []>} : vector<16x128xf32>, vector<128x128xf32>, vector<16x128xf32> -> vector<16x128xf32>
    %c0_9 = arith.constant 0 : index
    %c0_10 = arith.constant 0 : index
    %14 = vector.load %arg5[%c0_9, %c0_10] : memref<1x128xf32, #tpu.memory_space<vmem>>, vector<1x128xf32>
    %15 = vector.broadcast %14 : vector<1x128xf32> to vector<16x128xf32>
    %16 = arith.addf %13, %15 : vector<16x128xf32>
    %17 = arith.negf %16 : vector<16x128xf32>
    %18 = math.exp %17 : vector<16x128xf32>
    %cst_11 = arith.constant 1.000000e+00 : f32
    %19 = vector.broadcast %cst_11 : f32 to vector<16x128xf32>
    %20 = arith.addf %19, %18 : vector<16x128xf32>
    %21 = arith.divf %19, %20 : vector<16x128xf32>
    %22 = arith.mulf %16, %21 : vector<16x128xf32>
    %c0_12 = arith.constant 0 : index
    %c0_13 = arith.constant 0 : index
    %23 = vector.load %arg6[%c0_12, %c0_13] : memref<16x128xf32, #tpu.memory_space<vmem>>, vector<16x128xf32>
    tpu.vector_store %arg6[%c0_12, %c0_13], %22 {strides = array<i32>} : memref<16x128xf32, #tpu.memory_space<vmem>>, vector<16x128xf32>,
    return
  }
  func.func @transform_0(%arg0: i32) -> (i32, i32) {
    %c0_i32 = arith.constant 0 : i32
    %c0_i32_0 = arith.constant 0 : i32
    return %arg0, %c0_i32 : i32, i32
  }
  func.func @transform_1(%arg0: i32) -> (i32, i32) {
    %c0_i32 = arith.constant 0 : i32
    %c0_i32_0 = arith.constant 0 : i32
    %c0_i32_1 = arith.constant 0 : i32
    return %c0_i32, %c0_i32_0 : i32, i32
  }
  func.func @transform_2(%arg0: i32) -> (i32, i32) {
    %c0_i32 = arith.constant 0 : i32
    %c0_i32_0 = arith.constant 0 : i32
    %c0_i32_1 = arith.constant 0 : i32
    return %c0_i32, %c0_i32_0 : i32, i32
  }
  func.func @transform_3(%arg0: i32) -> (i32, i32) {
    %c0_i32 = arith.constant 0 : i32
    %c0_i32_0 = arith.constant 0 : i32
    %c0_i32_1 = arith.constant 0 : i32
    return %c0_i32, %c0_i32_0 : i32, i32
  }
  func.func @transform_4(%arg0: i32) -> (i32, i32) {
    %c0_i32 = arith.constant 0 : i32
    %c0_i32_0 = arith.constant 0 : i32
    %c0_i32_1 = arith.constant 0 : i32
    return %c0_i32, %c0_i32_0 : i32, i32
  }
  func.func @transform_5(%arg0: i32) -> (i32, i32) {
    %c0_i32 = arith.constant 0 : i32
    %c0_i32_0 = arith.constant 0 : i32
    return %arg0, %c0_i32 : i32, i32
  }
}

</mosaic_0001>

<llo_original>
// kernel: tpu_custom_call.1
$region0: #{tpu_custom_call.1}
  #allocation0 [shape = 'u32[]', space=smem, size = 0x4, offset = 0x4, fixed_abs, tag = 'smem constant byte address 0x4 - core index']
  #allocation1 [shape = 'u32[144,128]{1,0:T(1,128)}', space=vmem, size = 0x12000, scoped, tag = 'internal scratch']
  %s0 = inlined_call_operand.hbm [shape: f32[16,128], index: 0, kind: input, shape index: {}]
  %s1 = inlined_call_operand.hbm [shape: f32[128,128], index: 1, kind: input, shape index: {}]
  %s2 = inlined_call_operand.vmem [shape: f32[1,128], index: 2, kind: input, shape index: {}]
  %s3 = inlined_call_operand.hbm [shape: f32[128,128], index: 3, kind: input, shape index: {}]
  %s4 = inlined_call_operand.vmem [shape: f32[1,128], index: 4, kind: input, shape index: {}]
  %s5 = inlined_call_operand.hbm [shape: f32[16,128], index: 5, kind: output, shape index: {}]
  %s6 = sld [smem:[#allocation0]]
  $region42: #{tpu_custom_call.1} parent=0
    _
  %s8 = ssub.s32 1, %s6
  %s9 = scalar_select 0, %s8, %s6
  $region1: #{tpu_custom_call.1} parent=0
    #allocation2 [shape = 'u8[8192]{0}', space=vmem, size = 0x2000, scoped, tag = 'input window, operand 0, single buffered']
    #allocation3 [shape = 's32[1]{0}', space=sflag, size = 0x4, scoped, tag = 'scoped memory for tpu_custom_call.1']
    #allocation4 [shape = 's32[1]{0}', space=sflag, size = 0x4, scoped, tag = 'scoped memory for tpu_custom_call.1']
    #allocation5 [shape = 'u8[65536]{0}', space=vmem, size = 0x10000, scoped, tag = 'input window, operand 1, single buffered']
    #allocation6 [shape = 's32[1]{0}', space=sflag, size = 0x4, scoped, tag = 'scoped memory for tpu_custom_call.1']
    #allocation7 [shape = 'u8[65536]{0}', space=vmem, size = 0x10000, scoped, tag = 'input window, operand 3, single buffered']
    #allocation8 [shape = 'u8[8192]{0}', space=vmem, size = 0x2000, scoped, tag = 'output window, operand 0, single buffered']
    %10 = vsyncpa [#allocation3], 0
    %11 = vsyncpa [#allocation6], 0
    %12 = vsyncpa [#allocation4], 0
    // Predicated region
    $region2: #{tpu_custom_call.1} parent=1 // pred_check
      _
    $region3: #{tpu_custom_call.1} parent=1 // pred_check_branch
      %14 = sbr.rel (0) target = $region5
    $region4: #{tpu_custom_call.1} parent=1 // pred_region
      %s16 = ssub.s32 256, 256
      %17 = vsyncadd [#allocation3], %s16
      %s18 = sshll.u32 [#allocation2], 4
      %s19 = int_to_ptr.vmem [resolvable:$true] %s18
      %24 = dma.hbm_to_vmem [thread:$0]  %s0, 256, %s19, [#allocation3], 128, 128, 8
    $region5: #{tpu_custom_call.1} parent=1 // pred_fallthru
      _
    // Predicated region
    $region6: #{tpu_custom_call.1} parent=1 // pred_check
      _
    $region7: #{tpu_custom_call.1} parent=1 // pred_check_branch
      %26 = sbr.rel (0) target = $region9
    $region8: #{tpu_custom_call.1} parent=1 // pred_region
      %s28 = ssub.s32 2048, 2048
      %29 = vsyncadd [#allocation6], %s28
      %s30 = sshll.u32 [#allocation5], 4
      %s31 = int_to_ptr.vmem [resolvable:$true] %s30
      %36 = dma.hbm_to_vmem [thread:$0]  %s1, 2048, %s31, [#allocation6], 128, 128, 8
    $region9: #{tpu_custom_call.1} parent=1 // pred_fallthru
      _
    // Predicated region
    $region10: #{tpu_custom_call.1} parent=1 // pred_check
      _
    $region11: #{tpu_custom_call.1} parent=1 // pred_check_branch
      %38 = sbr.rel (0) target = $region13
    $region12: #{tpu_custom_call.1} parent=1 // pred_region
      _
    $region13: #{tpu_custom_call.1} parent=1 // pred_fallthru
      _
    // Predicated region
    $region14: #{tpu_custom_call.1} parent=1 // pred_check
      _
    $region15: #{tpu_custom_call.1} parent=1 // pred_check_branch
      %40 = sbr.rel (0) target = $region17
    $region16: #{tpu_custom_call.1} parent=1 // pred_region
      %s42 = ssub.s32 2048, 2048
      %43 = vsyncadd [#allocation6], %s42
      %s44 = sshll.u32 [#allocation7], 4
      %s45 = int_to_ptr.vmem [resolvable:$true] %s44
      %50 = dma.hbm_to_vmem [thread:$0]  %s3, 2048, %s45, [#allocation6], 128, 128, 8
    $region17: #{tpu_custom_call.1} parent=1 // pred_fallthru
      _
    // Predicated region
    $region18: #{tpu_custom_call.1} parent=1 // pred_check
      _
    $region19: #{tpu_custom_call.1} parent=1 // pred_check_branch
      %52 = sbr.rel (0) target = $region21
    $region20: #{tpu_custom_call.1} parent=1 // pred_region
      _
    $region21: #{tpu_custom_call.1} parent=1 // pred_fallthru
      _
    // Predicated region
    $region22: #{tpu_custom_call.1} parent=1 // pred_check
      _
    $region23: #{tpu_custom_call.1} parent=1 // pred_check_branch
      %54 = sbr.rel (0) target = $region25
    $region24: #{tpu_custom_call.1} parent=1 // pred_region
      %55 = dma.done [#allocation3], 256
    $region25: #{tpu_custom_call.1} parent=1 // pred_fallthru
      _
    // Predicated region
    $region26: #{tpu_custom_call.1} parent=1 // pred_check
      _
    $region27: #{tpu_custom_call.1} parent=1 // pred_check_branch
      %57 = sbr.rel (0) target = $region29
    $region28: #{tpu_custom_call.1} parent=1 // pred_region
      %58 = dma.done [#allocation6], 2048
    $region29: #{tpu_custom_call.1} parent=1 // pred_fallthru
      _
    // Predicated region
    $region30: #{tpu_custom_call.1} parent=1 // pred_check
      _
    $region31: #{tpu_custom_call.1} parent=1 // pred_check_branch
      %60 = sbr.rel (0) target = $region33
    $region32: #{tpu_custom_call.1} parent=1 // pred_region
      %61 = dma.done [#allocation6], 2048
    $region33: #{tpu_custom_call.1} parent=1 // pred_fallthru
      _
    %v62 = vld [vmem:[#allocation2] sm:$0xff]
    %v63 = vld [vmem:[#allocation2 + $0x8] sm:$0xff]
    %v64 = vld [vmem:[#allocation5] sm:$0xff]
    %v65 = vld [vmem:[#allocation5 + $0x8] sm:$0xff]
    %v66 = vld [vmem:[#allocation5 + $0x10] sm:$0xff]
    %v67 = vld [vmem:[#allocation5 + $0x18] sm:$0xff]
    %v68 = vld [vmem:[#allocation5 + $0x20] sm:$0xff]
    %v69 = vld [vmem:[#allocation5 + $0x28] sm:$0xff]
    %v70 = vld [vmem:[#allocation5 + $0x30] sm:$0xff]
    %v71 = vld [vmem:[#allocation5 + $0x38] sm:$0xff]
    %v72 = vld [vmem:[#allocation5 + $0x40] sm:$0xff]
    %v73 = vld [vmem:[#allocation5 + $0x48] sm:$0xff]
    %v74 = vld [vmem:[#allocation5 + $0x50] sm:$0xff]
    %v75 = vld [vmem:[#allocation5 + $0x58] sm:$0xff]
    %v76 = vld [vmem:[#allocation5 + $0x60] sm:$0xff]
    %v77 = vld [vmem:[#allocation5 + $0x68] sm:$0xff]
    %v78 = vld [vmem:[#allocation5 + $0x70] sm:$0xff]
    %v79 = vld [vmem:[#allocation5 + $0x78] sm:$0xff]
    %v80 = vld [vmem:[%s2] sm:$0x1]
    %v82 = vlaneseq
    %v83 = vshrl.u32 %v82, 7
    %v84 = vsub.s32 0, %v83
    %v85 = vrot.slane %v80, %v84
    %87 = vmatprep.subr.mxu0 0.0
    %88 = vmatpush1.msra.mxu0 %v64
    %89 = vmatprep.subr.mxu0 0.0
    %90 = vmatpush1.msra.mxu0 %v65
    %91 = vmatprep.subr.mxu0 0.0
    %92 = vmatpush1.msra.mxu0 %v66
    %93 = vmatprep.subr.mxu0 0.0
    %94 = vmatpush1.msra.mxu0 %v67
    %95 = vmatprep.subr.mxu0 0.0
    %96 = vmatpush1.msra.mxu0 %v68
    %97 = vmatprep.subr.mxu0 0.0
    %98 = vmatpush1.msra.mxu0 %v69
    %99 = vmatprep.subr.mxu0 0.0
    %100 = vmatpush1.msra.mxu0 %v70
    %101 = vmatprep.subr.mxu0 0.0
    %102 = vmatpush1.msra.mxu0 %v71
    %103 = vmatprep.subr.mxu0 0.0
    %104 = vmatpush1.msra.mxu0 %v72
    %105 = vmatprep.subr.mxu0 0.0
    %106 = vmatpush1.msra.mxu0 %v73
    %107 = vmatprep.subr.mxu0 0.0
    %108 = vmatpush1.msra.mxu0 %v74
    %109 = vmatprep.subr.mxu0 0.0
    %110 = vmatpush1.msra.mxu0 %v75
    %111 = vmatprep.subr.mxu0 0.0
    %112 = vmatpush1.msra.mxu0 %v76
    %113 = vmatprep.subr.mxu0 0.0
    %114 = vmatpush1.msra.mxu0 %v77
    %115 = vmatprep.subr.mxu0 0.0
    %116 = vmatpush1.msra.mxu0 %v78
    %117 = vmatprep.subr.mxu0 0.0
    %118 = vmatpush1.msra.mxu0 %v79
    %119 = vmatprep.subr.mxu0 0.0
    %120 = vmatpush1.msra.mxu0 0.0
    %121 = vmatprep.subr.mxu0 0.0
    %122 = vmatpush1.msra.mxu0 0.0
    %123 = vmatprep.subr.mxu0 0.0
    %124 = vmatpush1.msra.mxu0 0.0
    %125 = vmatprep.subr.mxu0 0.0
    %126 = vmatpush1.msra.mxu0 0.0
    %127 = vmatprep.subr.mxu0 0.0
    %128 = vmatpush1.msra.mxu0 0.0
    %129 = vmatprep.subr.mxu0 0.0
    %130 = vmatpush1.msra.mxu0 0.0
    %131 = vmatprep.subr.mxu0 0.0
    %132 = vmatpush1.msra.mxu0 0.0
    %133 = vmatprep.subr.mxu0 0.0
    %134 = vmatpush1.msra.mxu0 0.0
    %135 = vmatprep.subr.mxu0 0.0
    %136 = vmatpush1.msra.mxu0 0.0
    %137 = vmatprep.subr.mxu0 0.0
    %138 = vmatpush1.msra.mxu0 0.0
    %139 = vmatprep.subr.mxu0 0.0
    %140 = vmatpush1.msra.mxu0 0.0
    %141 = vmatprep.subr.mxu0 0.0
    %142 = vmatpush1.msra.mxu0 0.0
    %143 = vmatprep.subr.mxu0 0.0
    %144 = vmatpush1.msra.mxu0 0.0
    %145 = vmatprep.subr.mxu0 0.0
    %146 = vmatpush1.msra.mxu0 0.0
    %147 = vmatprep.subr.mxu0 0.0
    %148 = vmatpush1.msra.mxu0 0.0
    %149 = vmatprep.subr.mxu0 0.0
    %150 = vmatpush1.msra.mxu0 0.0
    %151 = vmatprep.mubr.f32.mxu0 0.0
    %152 = vmatmul.mubr.f32.gmra.mrb[0].mxu0 %v62
    %v153 = vpop.f32.mrb[0].mxu0
    %v154 = vadd.f32 %v85, %v153
    %v155 = vpop.f32.mrb[0].mxu0
    %156 = vmatprep.mubr.f32.mxu0 0.0
    %157 = vmatmul.mubr.f32.gmra.mrb[0].mxu0 %v63
    %v158 = vpop.f32.mrb[0].mxu0
    %v159 = vadd.f32 %v85, %v158
    %v160 = vpop.f32.mrb[0].mxu0
    %161 = vdwg.mxu0
    %v162 = vxor.u32 %v154, 2147483648
    %v163 = vxor.u32 %v159, 2147483648
    %v164 = vmul.f32 %v162, 1.442695
    %v165 = vpow.pop %v164
    %v166 = vmul.f32 %v163, 1.442695
    %v167 = vpow.pop %v166
    %v168 = vadd.f32 %v165, 1.0
    %v169 = vadd.f32 %v167, 1.0
    %v170 = vrcp.pop %v168
    %v171 = vmul.f32 1.0, %v170
    %v172 = vrcp.pop %v169
    %v173 = vmul.f32 1.0, %v172
    %v174 = vmul.f32 %v154, %v171
    %v175 = vmul.f32 %v159, %v173
    %v176 = vld [vmem:[#allocation7] sm:$0xff]
    %v177 = vld [vmem:[#allocation7 + $0x8] sm:$0xff]
    %v178 = vld [vmem:[#allocation7 + $0x10] sm:$0xff]
    %v179 = vld [vmem:[#allocation7 + $0x18] sm:$0xff]
    %v180 = vld [vmem:[#allocation7 + $0x20] sm:$0xff]
    %v181 = vld [vmem:[#allocation7 + $0x28] sm:$0xff]
    %v182 = vld [vmem:[#allocation7 + $0x30] sm:$0xff]
    %v183 = vld [vmem:[#allocation7 + $0x38] sm:$0xff]
    %v184 = vld [vmem:[#allocation7 + $0x40] sm:$0xff]
    %v185 = vld [vmem:[#allocation7 + $0x48] sm:$0xff]
    %v186 = vld [vmem:[#allocation7 + $0x50] sm:$0xff]
    %v187 = vld [vmem:[#allocation7 + $0x58] sm:$0xff]
    %v188 = vld [vmem:[#allocation7 + $0x60] sm:$0xff]
    %v189 = vld [vmem:[#allocation7 + $0x68] sm:$0xff]
    %v190 = vld [vmem:[#allocation7 + $0x70] sm:$0xff]
    %v191 = vld [vmem:[#allocation7 + $0x78] sm:$0xff]
    %v192 = vld [vmem:[%s4] sm:$0x1]
    %v194 = vlaneseq
    %v195 = vshrl.u32 %v194, 7
    %v196 = vsub.s32 0, %v195
    %v197 = vrot.slane %v192, %v196
    %199 = vmatprep.subr.mxu0 0.0
    %200 = vmatpush1.msra.mxu0 %v176
    %201 = vmatprep.subr.mxu0 0.0
    %202 = vmatpush1.msra.mxu0 %v177
    %203 = vmatprep.subr.mxu0 0.0
    %204 = vmatpush1.msra.mxu0 %v178
    %205 = vmatprep.subr.mxu0 0.0
    %206 = vmatpush1.msra.mxu0 %v179
    %207 = vmatprep.subr.mxu0 0.0
    %208 = vmatpush1.msra.mxu0 %v180
    %209 = vmatprep.subr.mxu0 0.0
    %210 = vmatpush1.msra.mxu0 %v181
    %211 = vmatprep.subr.mxu0 0.0
    %212 = vmatpush1.msra.mxu0 %v182
    %213 = vmatprep.subr.mxu0 0.0
    %214 = vmatpush1.msra.mxu0 %v183
    %215 = vmatprep.subr.mxu0 0.0
    %216 = vmatpush1.msra.mxu0 %v184
    %217 = vmatprep.subr.mxu0 0.0
    %218 = vmatpush1.msra.mxu0 %v185
    %219 = vmatprep.subr.mxu0 0.0
    %220 = vmatpush1.msra.mxu0 %v186
    %221 = vmatprep.subr.mxu0 0.0
    %222 = vmatpush1.msra.mxu0 %v187
    %223 = vmatprep.subr.mxu0 0.0
    %224 = vmatpush1.msra.mxu0 %v188
    %225 = vmatprep.subr.mxu0 0.0
    %226 = vmatpush1.msra.mxu0 %v189
    %227 = vmatprep.subr.mxu0 0.0
    %228 = vmatpush1.msra.mxu0 %v190
    %229 = vmatprep.subr.mxu0 0.0
    %230 = vmatpush1.msra.mxu0 %v191
    %231 = vmatprep.subr.mxu0 0.0
    %232 = vmatpush1.msra.mxu0 0.0
    %233 = vmatprep.subr.mxu0 0.0
    %234 = vmatpush1.msra.mxu0 0.0
    %235 = vmatprep.subr.mxu0 0.0
    %236 = vmatpush1.msra.mxu0 0.0
    %237 = vmatprep.subr.mxu0 0.0
    %238 = vmatpush1.msra.mxu0 0.0
    %239 = vmatprep.subr.mxu0 0.0
    %240 = vmatpush1.msra.mxu0 0.0
    %241 = vmatprep.subr.mxu0 0.0
    %242 = vmatpush1.msra.mxu0 0.0
    %243 = vmatprep.subr.mxu0 0.0
    %244 = vmatpush1.msra.mxu0 0.0
    %245 = vmatprep.subr.mxu0 0.0
    %246 = vmatpush1.msra.mxu0 0.0
    %247 = vmatprep.subr.mxu0 0.0
    %248 = vmatpush1.msra.mxu0 0.0
    %249 = vmatprep.subr.mxu0 0.0
    %250 = vmatpush1.msra.mxu0 0.0
    %251 = vmatprep.subr.mxu0 0.0
    %252 = vmatpush1.msra.mxu0 0.0
    %253 = vmatprep.subr.mxu0 0.0
    %254 = vmatpush1.msra.mxu0 0.0
    %255 = vmatprep.subr.mxu0 0.0
    %256 = vmatpush1.msra.mxu0 0.0
    %257 = vmatprep.subr.mxu0 0.0
    %258 = vmatpush1.msra.mxu0 0.0
    %259 = vmatprep.subr.mxu0 0.0
    %260 = vmatpush1.msra.mxu0 0.0
    %261 = vmatprep.subr.mxu0 0.0
    %262 = vmatpush1.msra.mxu0 0.0
    %263 = vmatprep.mubr.f32.mxu0 0.0
    %264 = vmatmul.mubr.f32.gmra.mrb[0].mxu0 %v174
    %v265 = vpop.f32.mrb[0].mxu0
    %v266 = vadd.f32 %v197, %v265
    %v267 = vpop.f32.mrb[0].mxu0
    %268 = vmatprep.mubr.f32.mxu0 0.0
    %269 = vmatmul.mubr.f32.gmra.mrb[0].mxu0 %v175
    %v270 = vpop.f32.mrb[0].mxu0
    %v271 = vadd.f32 %v197, %v270
    %v272 = vpop.f32.mrb[0].mxu0
    %273 = vdwg.mxu0
    %v274 = vxor.u32 %v266, 2147483648
    %v275 = vxor.u32 %v271, 2147483648
    %v276 = vmul.f32 %v274, 1.442695
    %v277 = vpow.pop %v276
    %v278 = vmul.f32 %v275, 1.442695
    %v279 = vpow.pop %v278
    %v280 = vadd.f32 %v277, 1.0
    %v281 = vadd.f32 %v279, 1.0
    %v282 = vrcp.pop %v280
    %v283 = vmul.f32 1.0, %v282
    %v284 = vrcp.pop %v281
    %v285 = vmul.f32 1.0, %v284
    %v286 = vmul.f32 %v266, %v283
    %v287 = vmul.f32 %v271, %v285
    %288 = vst [vmem:[#allocation8] sm:$0xff] %v286
    %289 = vst [vmem:[#allocation8 + $0x8] sm:$0xff] %v287
    // Predicated region
    $region34: #{tpu_custom_call.1} parent=1 // pred_check
      _
    $region35: #{tpu_custom_call.1} parent=1 // pred_check_branch
      %291 = sbr.rel (0) target = $region37
    $region36: #{tpu_custom_call.1} parent=1 // pred_region
      %s293 = ssub.s32 256, 256
      %294 = vsyncadd [#allocation4], %s293
      %s295 = sshll.u32 [#allocation8], 4
      %s296 = int_to_ptr.vmem [resolvable:$true] %s295
      %301 = dma.vmem_to_hbm [thread:$0]  %s296, 256, %s5, [#allocation4], 128, 128, 8
    $region37: #{tpu_custom_call.1} parent=1 // pred_fallthru
      _
    // Predicated region
    $region38: #{tpu_custom_call.1} parent=1 // pred_check
      _
    $region39: #{tpu_custom_call.1} parent=1 // pred_check_branch
      %303 = sbr.rel (0) target = $region41
    $region40: #{tpu_custom_call.1} parent=1 // pred_region
      %304 = dma.done [#allocation4], 256
    $region41: #{tpu_custom_call.1} parent=1 // pred_fallthru
      _
    %305 = vsyncpa [#allocation3], 1
    %306 = vsyncpa [#allocation6], 1
    %307 = vsyncpa [#allocation4], 1

</llo_original>
